<compile_context>
chip_gen: v5e
topology: v5e:2x2
jax: 0.10.0
libtpu: 0.0.40
codegen_flags: <defaults>
</compile_context>

<pallas_src>
import functools

import jax
import jax.numpy as jnp
from jax.experimental import pallas as pl
from jax.experimental.pallas import tpu as pltpu


# ----------------------------------------------------------------------------
# Kernel
# ----------------------------------------------------------------------------
def policy_mlp_kernel(x_ref, w1_ref, b1_ref, w2_ref, b2_ref, w3_ref, b3_ref,
                      o_ref, *, act_dtype):
    """Fused 3-layer MLP with tanh on hidden layers and on the output.

    Matmuls run on the MXU with f32 accumulation; the tanh activations run in
    `act_dtype` (bf16 on v6e/v7x where the EUP has native bf16 -> 2x
    transcendental throughput; f32 on v5e and older).
    """
    x = x_ref[...]
    mm_dtype = x.dtype  # streamed compute dtype (bf16 or f32)

    def layer(h, w_ref, b_ref):
        acc = jnp.dot(h, w_ref[...], preferred_element_type=jnp.float32)
        acc = acc + b_ref[...].astype(jnp.float32)
        return jnp.tanh(acc.astype(act_dtype))

    h1 = layer(x, w1_ref, b1_ref).astype(mm_dtype)
    h2 = layer(h1, w2_ref, b2_ref).astype(mm_dtype)
    out = layer(h2, w3_ref, b3_ref)
    # TODO(synk): if profiling shows masked vst.msk hot on the narrow (A=8)
    # output, repack to a lane-dense (tb*A//128, 128) slab before the store.
    o_ref[...] = out.astype(o_ref.dtype)


# ----------------------------------------------------------------------------
# Wrapper
# ----------------------------------------------------------------------------
def _default_act_dtype(compute_dtype):
    """bf16 tanh only on chips whose EUP/VPU support bf16 (v6e / v7x)."""
    if jnp.dtype(compute_dtype) != jnp.dtype(jnp.bfloat16):
        return jnp.float32
    try:
        kind = jax.devices()[0].device_kind.lower()
    except Exception:  # pragma: no cover
        return jnp.float32
    if "v6" in kind or "v7" in kind:
        return jnp.bfloat16
    return jnp.float32


def _choose_batch_tile(B, requested, sublane):
    """Pick a batch tile: sublane-aligned divisor of B, capped at ~1024 rows."""
    if requested is not None:
        tb = min(requested, B)
        assert B % tb == 0, "batch_tile must divide the batch size"
        assert tb == B or tb % sublane == 0, (
            f"batch_tile must be a multiple of {sublane} (or equal to batch)")
        return tb
    target = 1024  # >=512-row tiles reach ~85% of HBM roofline in sweeps
    if B <= target:
        return B
    t = target - (target % sublane)
    while t >= sublane:
        if B % t == 0:
            return t
        t -= sublane
    return B  # no aligned divisor found; fall back to a single full block


def state_independent_policy_forward(states, params, *, batch_tile=None,
                                     compute_dtype=jnp.bfloat16,
                                     act_dtype=None):
    """tanh(MLP(states)) via a single fused Pallas kernel, tiled over batch."""
    w1, b1, w2, b2, w3, b3 = params
    B, S = states.shape
    H1 = w1.shape[1]
    H2 = w2.shape[1]
    A = w3.shape[1]
    out_dtype = states.dtype

    compute_dtype = jnp.dtype(compute_dtype)
    if act_dtype is None:
        act_dtype = _default_act_dtype(compute_dtype)

    # Sublane packing: 8 rows per vreg for f32, 16 for bf16.
    sublane = 16 if compute_dtype == jnp.dtype(jnp.bfloat16) else 8
    tb = _choose_batch_tile(B, batch_tile, sublane)
    num_steps = B // tb

    # Stream states/weights in the (possibly reduced) compute dtype; keep the
    # tiny biases in f32 for the f32 bias-add on top of the f32 accumulator.
    x = states.astype(compute_dtype)
    w1c, w2c, w3c = (w.astype(compute_dtype) for w in (w1, w2, w3))
    b1c, b2c, b3c = (b.astype(jnp.float32) for b in (b1, b2, b3))

    # Weights/biases are small and identical every grid step (constant index
    # map -> fetched once); only the batch axis of states/output is tiled.
    def full_spec(shape):
        return pl.BlockSpec(shape, lambda i: tuple(0 for _ in shape))

    # Deep-buffer the tiny per-step state blocks to hide DMA issue latency.
    if num_steps >= 3:
        x_spec = pl.BlockSpec((tb, S), lambda i: (i, 0),
                              pipeline_mode=pl.Buffered(3))
    else:
        x_spec = pl.BlockSpec((tb, S), lambda i: (i, 0))

    kernel = functools.partial(policy_mlp_kernel, act_dtype=act_dtype)

    return pl.pallas_call(
        kernel,
        out_shape=jax.ShapeDtypeStruct((B, A), out_dtype),
        grid_spec=pl.GridSpec(
            grid=(num_steps,),
            in_specs=[
                x_spec,
                full_spec((S, H1)),
                full_spec((1, H1)),
                full_spec((H1, H2)),
                full_spec((1, H2)),
                full_spec((H2, A)),
                full_spec((1, A)),
            ],
            out_specs=pl.BlockSpec((tb, A), lambda i: (i, 0)),
        ),
        compiler_params=pltpu.CompilerParams(
            dimension_semantics=("parallel",),  # shards batch across TCs on v7x
            vmem_limit_bytes=32 * 1024 * 1024,  # safe on v5e/v6e/v7x
        ),
    )(x, w1c, b1c, w2c, b2c, w3c, b3c)


# ----------------------------------------------------------------------------
# Params / reference
# ----------------------------------------------------------------------------
def init_policy_params(key, state_dim, action_dim, hidden_units=(64, 64)):
    """Deterministic synthetic init (PyTorch Linear-style uniform bounds).

    Weights are returned in (in, out) layout (i.e. already W.T relative to
    torch.nn.Linear's (out, in) storage).
    """
    dims = [state_dim, *hidden_units, action_dim]
    params = []
    for i in range(len(dims) - 1):
        fan_in, fan_out = dims[i], dims[i + 1]
        key, kw, kb = jax.random.split(key, 3)
        bound = 1.0 / jnp.sqrt(fan_in)
        w = jax.random.uniform(kw, (fan_in, fan_out), jnp.float32, -bound, bound)
        b = jax.random.uniform(kb, (1, fan_out), jnp.float32, -bound, bound)
        params.extend([w, b])
    # log_stds exists in the module but is unused in forward(); it only matters
    # for sample()/evaluate_log_pi().
    log_stds = jnp.zeros((1, action_dim), jnp.float32)
    return tuple(params), log_stds


def reference_forward(states, params):
    w1, b1, w2, b2, w3, b3 = params
    h = jnp.tanh(states @ w1 + b1)
    h = jnp.tanh(h @ w2 + b2)
    return jnp.tanh(h @ w3 + b3)


# ----------------------------------------------------------------------------
# Demo / self-check
# ----------------------------------------------------------------------------
if __name__ == "__main__":
    key = jax.random.PRNGKey(0)
    state_dim, action_dim = 16, 8
    hidden_units = (64, 64)

    kx, kx2, kp = jax.random.split(key, 3)
    params, log_stds = init_policy_params(kp, state_dim, action_dim, hidden_units)

    # 1) Small-batch exact check in pure f32 (tight tolerance).
    batch = 8
    states = jax.random.normal(kx, (batch, state_dim), jnp.float32)
    out = state_independent_policy_forward(
        states, params, compute_dtype=jnp.float32, act_dtype=jnp.float32)
    out = jax.block_until_ready(out)
    ref = reference_forward(states, params)
    assert out.shape == (batch, action_dim)
    assert jnp.allclose(out, ref, atol=1e-5, rtol=1e-5), "f32 mismatch vs reference"

    # 2) Tiled + bf16-streamed path (grid of 3, Buffered(3) prefetch, bf16 MXU).
    batch2 = 384
    states2 = jax.random.normal(kx2, (batch2, state_dim), jnp.float32)
    out2 = state_independent_policy_forward(states2, params, batch_tile=128)
    out2 = jax.block_until_ready(out2)
    ref2 = reference_forward(states2, params)
    assert out2.shape == (batch2, action_dim)
    assert jnp.allclose(out2, ref2, atol=5e-2, rtol=5e-2), "bf16 mismatch vs reference"

    print("KERNEL_OK")
</pallas_src>

<mosaic_0001>
module attributes {stable_mosaic.version = 11 : i64} {
  func.func @policy_mlp_kernel(%arg0: i32, %arg1: memref<8x16xf32, #tpu.memory_space<vmem>>, %arg2: memref<16x64xf32, #tpu.memory_space<vmem>>, %arg3: memref<1x64xf32, #tpu.memory_space<vmem>>, %arg4: memref<64x64xf32, #tpu.memory_space<vmem>>, %arg5: memref<1x64xf32, #tpu.memory_space<vmem>>, %arg6: memref<64x8xf32, #tpu.memory_space<vmem>>, %arg7: memref<1x8xf32, #tpu.memory_space<vmem>>, %arg8: memref<8x8xf32, #tpu.memory_space<vmem>>) attributes {dimension_semantics = [#tpu.dimension_semantics<parallel>], iteration_bounds = array<i64: 1>, scalar_prefetch = 0 : i64, scratch_operands = 0 : i64, tpu.core_type = #tpu.core_type<tc>, window_params = [{transform_indices = @transform_0, window_bounds = array<i64: 8, 16>}, {pipeline_mode = #tpu.pipeline_mode<synchronous>, transform_indices = @transform_1, window_bounds = array<i64: 16, 64>}, {pipeline_mode = #tpu.pipeline_mode<synchronous>, transform_indices = @transform_2, window_bounds = array<i64: 1, 64>}, {pipeline_mode = #tpu.pipeline_mode<synchronous>, transform_indices = @transform_3, window_bounds = array<i64: 64, 64>}, {pipeline_mode = #tpu.pipeline_mode<synchronous>, transform_indices = @transform_4, window_bounds = array<i64: 1, 64>}, {pipeline_mode = #tpu.pipeline_mode<synchronous>, transform_indices = @transform_5, window_bounds = array<i64: 64, 8>}, {pipeline_mode = #tpu.pipeline_mode<synchronous>, transform_indices = @transform_6, window_bounds = array<i64: 1, 8>}, {transform_indices = @transform_7, window_bounds = array<i64: 8, 8>}]} {
    %c0 = arith.constant 0 : index
    %c0_0 = arith.constant 0 : index
    %0 = vector.load %arg1[%c0, %c0_0] : memref<8x16xf32, #tpu.memory_space<vmem>>, vector<8x16xf32>
    %c0_1 = arith.constant 0 : index
    %c0_2 = arith.constant 0 : index
    %1 = vector.load %arg2[%c0_1, %c0_2] : memref<16x64xf32, #tpu.memory_space<vmem>>, vector<16x64xf32>
    %cst = arith.constant dense<0.000000e+00> : vector<8x64xf32>
    %2 = tpu.matmul %0, %1, %cst {dimension_numbers = #tpu.dot_dimension_numbers<[1], [0], [0], [1], [0, 0, 1, 1], [], []>} : vector<8x16xf32>, vector<16x64xf32>, vector<8x64xf32> -> vector<8x64xf32>
    %c0_3 = arith.constant 0 : index
    %c0_4 = arith.constant 0 : index
    %3 = vector.load %arg3[%c0_3, %c0_4] : memref<1x64xf32, #tpu.memory_space<vmem>>, vector<1x64xf32>
    %4 = vector.broadcast %3 : vector<1x64xf32> to vector<8x64xf32>
    %5 = arith.addf %2, %4 : vector<8x64xf32>
    %6 = math.tanh %5 : vector<8x64xf32>
    %c0_5 = arith.constant 0 : index
    %c0_6 = arith.constant 0 : index
    %7 = vector.load %arg4[%c0_5, %c0_6] : memref<64x64xf32, #tpu.memory_space<vmem>>, vector<64x64xf32>
    %cst_7 = arith.constant dense<0.000000e+00> : vector<8x64xf32>
    %8 = tpu.matmul %6, %7, %cst_7 {dimension_numbers = #tpu.dot_dimension_numbers<[1], [0], [0], [1], [0, 0, 1, 1], [], []>} : vector<8x64xf32>, vector<64x64xf32>, vector<8x64xf32> -> vector<8x64xf32>
    %c0_8 = arith.constant 0 : index
    %c0_9 = arith.constant 0 : index
    %9 = vector.load %arg5[%c0_8, %c0_9] : memref<1x64xf32, #tpu.memory_space<vmem>>, vector<1x64xf32>
    %10 = vector.broadcast %9 : vector<1x64xf32> to vector<8x64xf32>
    %11 = arith.addf %8, %10 : vector<8x64xf32>
    %12 = math.tanh %11 : vector<8x64xf32>
    %c0_10 = arith.constant 0 : index
    %c0_11 = arith.constant 0 : index
    %13 = vector.load %arg6[%c0_10, %c0_11] : memref<64x8xf32, #tpu.memory_space<vmem>>, vector<64x8xf32>
    %cst_12 = arith.constant dense<0.000000e+00> : vector<8x8xf32>
    %14 = tpu.matmul %12, %13, %cst_12 {dimension_numbers = #tpu.dot_dimension_numbers<[1], [0], [0], [1], [0, 0, 1, 1], [], []>} : vector<8x64xf32>, vector<64x8xf32>, vector<8x8xf32> -> vector<8x8xf32>
    %c0_13 = arith.constant 0 : index
    %c0_14 = arith.constant 0 : index
    %15 = vector.load %arg7[%c0_13, %c0_14] : memref<1x8xf32, #tpu.memory_space<vmem>>, vector<1x8xf32>
    %16 = vector.broadcast %15 : vector<1x8xf32> to vector<8x8xf32>
    %17 = arith.addf %14, %16 : vector<8x8xf32>
    %18 = math.tanh %17 : vector<8x8xf32>
    %c0_15 = arith.constant 0 : index
    %c0_16 = arith.constant 0 : index
    %19 = vector.load %arg8[%c0_15, %c0_16] : memref<8x8xf32, #tpu.memory_space<vmem>>, vector<8x8xf32>
    tpu.vector_store %arg8[%c0_15, %c0_16], %18 {strides = array<i32>} : memref<8x8xf32, #tpu.memory_space<vmem>>, vector<8x8xf32>,
    return
  }
  func.func @transform_0(%arg0: i32) -> (i32, i32) {
    %c0_i32 = arith.constant 0 : i32
    %c0_i32_0 = arith.constant 0 : i32
    return %arg0, %c0_i32 : i32, i32
  }
  func.func @transform_1(%arg0: i32) -> (i32, i32) {
    %c0_i32 = arith.constant 0 : i32
    %c0_i32_0 = arith.constant 0 : i32
    %c0_i32_1 = arith.constant 0 : i32
    return %c0_i32, %c0_i32_0 : i32, i32
  }
  func.func @transform_2(%arg0: i32) -> (i32, i32) {
    %c0_i32 = arith.constant 0 : i32
    %c0_i32_0 = arith.constant 0 : i32
    %c0_i32_1 = arith.constant 0 : i32
    return %c0_i32, %c0_i32_0 : i32, i32
  }
  func.func @transform_3(%arg0: i32) -> (i32, i32) {
    %c0_i32 = arith.constant 0 : i32
    %c0_i32_0 = arith.constant 0 : i32
    %c0_i32_1 = arith.constant 0 : i32
    return %c0_i32, %c0_i32_0 : i32, i32
  }
  func.func @transform_4(%arg0: i32) -> (i32, i32) {
    %c0_i32 = arith.constant 0 : i32
    %c0_i32_0 = arith.constant 0 : i32
    %c0_i32_1 = arith.constant 0 : i32
    return %c0_i32, %c0_i32_0 : i32, i32
  }
  func.func @transform_5(%arg0: i32) -> (i32, i32) {
    %c0_i32 = arith.constant 0 : i32
    %c0_i32_0 = arith.constant 0 : i32
    %c0_i32_1 = arith.constant 0 : i32
    return %c0_i32, %c0_i32_0 : i32, i32
  }
  func.func @transform_6(%arg0: i32) -> (i32, i32) {
    %c0_i32 = arith.constant 0 : i32
    %c0_i32_0 = arith.constant 0 : i32
    %c0_i32_1 = arith.constant 0 : i32
    return %c0_i32, %c0_i32_0 : i32, i32
  }
  func.func @transform_7(%arg0: i32) -> (i32, i32) {
    %c0_i32 = arith.constant 0 : i32
    %c0_i32_0 = arith.constant 0 : i32
    return %arg0, %c0_i32 : i32, i32
  }
}

</mosaic_0001>

<llo_original>
// kernel: tpu_custom_call.1
$region0: #{tpu_custom_call.1}
  #allocation0 [shape = 'u32[]', space=smem, size = 0x4, offset = 0x4, fixed_abs, tag = 'smem constant byte address 0x4 - core index']
  #allocation1 [shape = 'u32[72,128]{1,0:T(1,128)}', space=vmem, size = 0x9000, scoped, tag = 'internal scratch']
  %s0 = inlined_call_operand.vmem [shape: f32[8,16], index: 0, kind: input, shape index: {}]
  %s1 = inlined_call_operand.hbm [shape: f32[16,64], index: 1, kind: input, shape index: {}]
  %s2 = inlined_call_operand.vmem [shape: f32[1,64], index: 2, kind: input, shape index: {}]
  %s3 = inlined_call_operand.vmem [shape: f32[64,64], index: 3, kind: input, shape index: {}]
  %s4 = inlined_call_operand.vmem [shape: f32[1,64], index: 4, kind: input, shape index: {}]
  %s5 = inlined_call_operand.vmem [shape: f32[64,8], index: 5, kind: input, shape index: {}]
  %s6 = inlined_call_operand.vmem [shape: f32[1,8], index: 6, kind: input, shape index: {}]
  %s7 = inlined_call_operand.hbm [shape: f32[8,8], index: 7, kind: output, shape index: {}]
  %s8 = sld [smem:[#allocation0]]
  $region42: #{tpu_custom_call.1} parent=0
    _
  %s10 = ssub.s32 1, %s8
  %s11 = scalar_select 0, %s10, %s8
  $region1: #{tpu_custom_call.1} parent=0
    #allocation2 [shape = 'u8[8192]{0}', space=vmem, size = 0x2000, scoped, tag = 'input window, operand 1, single buffered']
    #allocation3 [shape = 's32[1]{0}', space=sflag, size = 0x4, scoped, tag = 'scoped memory for tpu_custom_call.1']
    #allocation4 [shape = 's32[1]{0}', space=sflag, size = 0x4, scoped, tag = 'scoped memory for tpu_custom_call.1']
    #allocation5 [shape = 'u8[4096]{0}', space=vmem, size = 0x1000, scoped, tag = 'output window, operand 0, single buffered']
    %12 = vsyncpa [#allocation3], 0
    %13 = vsyncpa [#allocation4], 0
    // Predicated region
    $region2: #{tpu_custom_call.1} parent=1 // pred_check
      _
    $region3: #{tpu_custom_call.1} parent=1 // pred_check_branch
      %15 = sbr.rel (0) target = $region5
    $region4: #{tpu_custom_call.1} parent=1 // pred_region
      _
    $region5: #{tpu_custom_call.1} parent=1 // pred_fallthru
      _
    // Predicated region
    $region6: #{tpu_custom_call.1} parent=1 // pred_check
      _
    $region7: #{tpu_custom_call.1} parent=1 // pred_check_branch
      %17 = sbr.rel (0) target = $region9
    $region8: #{tpu_custom_call.1} parent=1 // pred_region
      %19 = vsyncadd [#allocation3], 0
      %s20 = sshll.u32 %s1, 4
      %s21 = int_to_ptr.hbm [resolvable:$true] %s20
      %s22 = sshll.u32 [#allocation2], 4
      %s23 = int_to_ptr.vmem [resolvable:$true] %s22
      %28 = dma.hbm_to_vmem [thread:$0]  %s21, 256, %s23, [#allocation3], 128, 128, 8
    $region9: #{tpu_custom_call.1} parent=1 // pred_fallthru
      _
    // Predicated region
    $region10: #{tpu_custom_call.1} parent=1 // pred_check
      _
    $region11: #{tpu_custom_call.1} parent=1 // pred_check_branch
      %30 = sbr.rel (0) target = $region13
    $region12: #{tpu_custom_call.1} parent=1 // pred_region
      _
    $region13: #{tpu_custom_call.1} parent=1 // pred_fallthru
      _
    // Predicated region
    $region14: #{tpu_custom_call.1} parent=1 // pred_check
      _
    $region15: #{tpu_custom_call.1} parent=1 // pred_check_branch
      %32 = sbr.rel (0) target = $region17
    $region16: #{tpu_custom_call.1} parent=1 // pred_region
      _
    $region17: #{tpu_custom_call.1} parent=1 // pred_fallthru
      _
    // Predicated region
    $region18: #{tpu_custom_call.1} parent=1 // pred_check
      _
    $region19: #{tpu_custom_call.1} parent=1 // pred_check_branch
      %34 = sbr.rel (0) target = $region21
    $region20: #{tpu_custom_call.1} parent=1 // pred_region
      _
    $region21: #{tpu_custom_call.1} parent=1 // pred_fallthru
      _
    // Predicated region
    $region22: #{tpu_custom_call.1} parent=1 // pred_check
      _
    $region23: #{tpu_custom_call.1} parent=1 // pred_check_branch
      %36 = sbr.rel (0) target = $region25
    $region24: #{tpu_custom_call.1} parent=1 // pred_region
      _
    $region25: #{tpu_custom_call.1} parent=1 // pred_fallthru
      _
    // Predicated region
    $region26: #{tpu_custom_call.1} parent=1 // pred_check
      _
    $region27: #{tpu_custom_call.1} parent=1 // pred_check_branch
      %38 = sbr.rel (0) target = $region29
    $region28: #{tpu_custom_call.1} parent=1 // pred_region
      _
    $region29: #{tpu_custom_call.1} parent=1 // pred_fallthru
      _
    // Predicated region
    $region30: #{tpu_custom_call.1} parent=1 // pred_check
      _
    $region31: #{tpu_custom_call.1} parent=1 // pred_check_branch
      %40 = sbr.rel (0) target = $region33
    $region32: #{tpu_custom_call.1} parent=1 // pred_region
      %42 = dma.done [#allocation3], 256
    $region33: #{tpu_custom_call.1} parent=1 // pred_fallthru
      _
    %v43 = vld [vmem:[%s0] sm:$0xff]
    %v44 = vld [vmem:[#allocation2] sm:$0xff]
    %v45 = vld [vmem:[#allocation2 + $0x8] sm:$0xff]
    %v46 = vld [vmem:[%s2] sm:$0x1]
    %v48 = vperm.slane %v46, 0
    %vm50 = vcmask 130048
    %v52 = vsel %vm50, %v43, 0
    %54 = vmatpush.msra.mxu0 0.0
    %55 = vmatpush.msra.mxu0 0.0
    %56 = vmatpush.msra.mxu0 0.0
    %57 = vmatpush.msra.mxu0 0.0
    %58 = vmatpush.msra.mxu0 0.0
    %59 = vmatpush.msra.mxu0 0.0
    %60 = vmatpush.msra.mxu0 0.0
    %61 = vmatpush.msra.mxu0 0.0
    %62 = vmatpush.msra.mxu0 0.0
    %63 = vmatpush.msra.mxu0 0.0
    %64 = vmatpush.msra.mxu0 0.0
    %65 = vmatpush.msra.mxu0 0.0
    %66 = vmatpush.msra.mxu0 0.0
    %67 = vmatpush.msra.mxu0 0.0
    %68 = vmatpush.msra.mxu0 %v45
    %69 = vmatpush.msra.mxu0 %v44
    %70 = vmatmul.f32.gmra.mxu0 %v52
    %v71 = vpop.f32.mrf.mxu0
    %v72 = vadd.f32 %v48, %v71
    %73 = vdwg.mxu0
    %v74 = vtanh.pop %v72
    %v75 = vld [vmem:[%s3] sm:$0xff]
    %v76 = vld [vmem:[%s3 + $0x8] sm:$0xff]
    %v77 = vld [vmem:[%s3 + $0x10] sm:$0xff]
    %v78 = vld [vmem:[%s3 + $0x18] sm:$0xff]
    %v79 = vld [vmem:[%s3 + $0x20] sm:$0xff]
    %v80 = vld [vmem:[%s3 + $0x28] sm:$0xff]
    %v81 = vld [vmem:[%s3 + $0x30] sm:$0xff]
    %v82 = vld [vmem:[%s3 + $0x38] sm:$0xff]
    %v83 = vld [vmem:[%s4] sm:$0x1]
    %v85 = vperm.slane %v83, 0
    %vm87 = vcmask 523264
    %v89 = vsel %vm87, %v74, 0
    %91 = vmatpush.msra.mxu0 0.0
    %92 = vmatpush.msra.mxu0 0.0
    %93 = vmatpush.msra.mxu0 0.0
    %94 = vmatpush.msra.mxu0 0.0
    %95 = vmatpush.msra.mxu0 0.0
    %96 = vmatpush.msra.mxu0 0.0
    %97 = vmatpush.msra.mxu0 0.0
    %98 = vmatpush.msra.mxu0 0.0
    %99 = vmatpush.msra.mxu0 %v82
    %100 = vmatpush.msra.mxu0 %v81
    %101 = vmatpush.msra.mxu0 %v80
    %102 = vmatpush.msra.mxu0 %v79
    %103 = vmatpush.msra.mxu0 %v78
    %104 = vmatpush.msra.mxu0 %v77
    %105 = vmatpush.msra.mxu0 %v76
    %106 = vmatpush.msra.mxu0 %v75
    %107 = vmatmul.f32.gmra.mxu0 %v89
    %v108 = vpop.f32.mrf.mxu0
    %v109 = vadd.f32 %v85, %v108
    %110 = vdwg.mxu0
    %v111 = vtanh.pop %v109
    %v112 = vld [vmem:[%s5] sm:$0xff]
    %v113 = vld [vmem:[%s5 + $0x8] sm:$0xff]
    %v114 = vld [vmem:[%s5 + $0x10] sm:$0xff]
    %v115 = vld [vmem:[%s5 + $0x18] sm:$0xff]
    %v116 = vld [vmem:[%s5 + $0x20] sm:$0xff]
    %v117 = vld [vmem:[%s5 + $0x28] sm:$0xff]
    %v118 = vld [vmem:[%s5 + $0x30] sm:$0xff]
    %v119 = vld [vmem:[%s5 + $0x38] sm:$0xff]
    %v120 = vld [vmem:[%s6] sm:$0x1]
    %v122 = vperm.slane %v120, 0
    %v125 = vsel %vm87, %v111, 0
    %127 = vmatpush.msra.mxu0 0.0
    %128 = vmatpush.msra.mxu0 0.0
    %129 = vmatpush.msra.mxu0 0.0
    %130 = vmatpush.msra.mxu0 0.0
    %131 = vmatpush.msra.mxu0 0.0
    %132 = vmatpush.msra.mxu0 0.0
    %133 = vmatpush.msra.mxu0 0.0
    %134 = vmatpush.msra.mxu0 0.0
    %135 = vmatpush.msra.mxu0 %v119
    %136 = vmatpush.msra.mxu0 %v118
    %137 = vmatpush.msra.mxu0 %v117
    %138 = vmatpush.msra.mxu0 %v116
    %139 = vmatpush.msra.mxu0 %v115
    %140 = vmatpush.msra.mxu0 %v114
    %141 = vmatpush.msra.mxu0 %v113
    %142 = vmatpush.msra.mxu0 %v112
    %143 = vmatmul.f32.gmra.mxu0 %v125
    %v144 = vpop.f32.mrf.mxu0
    %v145 = vadd.f32 %v122, %v144
    %146 = vdwg.mxu0
    %v147 = vtanh.pop %v145
    %vm148 = vcmask 64512
    %149 = vst.msk [vmem:[#allocation5] sm:$0xff] %vm148, %v147
    // Predicated region
    $region34: #{tpu_custom_call.1} parent=1 // pred_check
      _
    $region35: #{tpu_custom_call.1} parent=1 // pred_check_branch
      %151 = sbr.rel (0) target = $region37
    $region36: #{tpu_custom_call.1} parent=1 // pred_region
      %153 = vsyncadd [#allocation4], 0
      %s155 = sshll.u32 [#allocation5], 4
      %s156 = int_to_ptr.vmem [resolvable:$true] %s155
      %s157 = sshll.u32 %s7, 4
      %s158 = int_to_ptr.hbm [resolvable:$true] %s157
      %160 = dma.vmem_to_hbm [thread:$0]  %s156, 128, %s158, [#allocation4]
    $region37: #{tpu_custom_call.1} parent=1 // pred_fallthru
      _
    // Predicated region
    $region38: #{tpu_custom_call.1} parent=1 // pred_check
      _
    $region39: #{tpu_custom_call.1} parent=1 // pred_check_branch
      %162 = sbr.rel (0) target = $region41
    $region40: #{tpu_custom_call.1} parent=1 // pred_region
      %164 = dma.done [#allocation4], 128
    $region41: #{tpu_custom_call.1} parent=1 // pred_fallthru
      _
    %165 = vsyncpa [#allocation3], 1
    %166 = vsyncpa [#allocation4], 1

</llo_original>
